<compile_context>
chip_gen: v6e
topology: v6e:2x2x1
jax: 0.10.0
libtpu: 0.0.40
codegen_flags: <defaults>
</compile_context>

<pallas_src>
import functools

import numpy as np
import jax
import jax.numpy as jnp
from jax.experimental import pallas as pl
from jax.experimental.pallas import tpu as pltpu


def _round_up(x: int, m: int) -> int:
    return ((x + m - 1) // m) * m


def _pick_operand_dtypes(in_features: int, out_features: int, operand_dtype=None):
    """Pick MXU operand / accumulator dtypes.

    int8 on v5e/v6e (native int MXU), fp8 e4m3 on v7x (its MXU has no int path),
    bf16 otherwise or when I/O are not lane-aligned (keeps small/unaligned
    shapes on the safest layout path).  All representable values here are
    {0,1} / {-1,0,1}, so every choice is exact.
    """
    if operand_dtype is not None:
        acc = jnp.int32 if jnp.issubdtype(operand_dtype, jnp.integer) else jnp.float32
        return operand_dtype, acc
    if in_features % 128 != 0 or out_features % 128 != 0:
        return jnp.bfloat16, jnp.float32
    kind = jax.devices()[0].device_kind.lower()
    if "v7" in kind or "7x" in kind:
        return jnp.float8_e4m3fn, jnp.float32
    if "v5" in kind or "v6" in kind:
        return jnp.int8, jnp.int32
    return jnp.bfloat16, jnp.float32


# ---------------------------------------------------------------------------
# Kernels
# ---------------------------------------------------------------------------
def _resident_kernel(x_ref, w_ref, b_ref, o_ref, *, op_dtype, acc_dtype):
    """Weight-resident path: one MXU matmul per M tile, bias fused into the store."""
    x = x_ref[...].astype(op_dtype)                       # in-kernel cast (VPU, free under MXU)
    acc = jnp.dot(x, w_ref[...], preferred_element_type=acc_dtype)
    o_ref[...] = acc.astype(jnp.float32) + b_ref[...]


def _tiled_kernel(x_ref, w_ref, b_ref, o_ref, *, op_dtype, acc_dtype):
    """K/N-tiled fallback: accumulate directly into the resident f32 output block."""
    k = pl.program_id(2)

    @pl.when(k == 0)
    def _init():
        o_ref[...] = jnp.broadcast_to(b_ref[...], o_ref.shape)

    x = x_ref[...].astype(op_dtype)
    acc = jnp.dot(x, w_ref[...], preferred_element_type=acc_dtype)
    o_ref[...] += acc.astype(jnp.float32)


# ---------------------------------------------------------------------------
# Wrapper
# ---------------------------------------------------------------------------
def evo_binarized_forward(
    x,
    w,
    *,
    operand_dtype=None,
    force_tiled: bool = False,
    tm_max: int = 512,
    tn_max: int = 512,
    tk_max: int = 2048,
    max_resident_bytes: int = 36 * 1024 * 1024,
):
    """EvoBinarizedLayer.forward for offspring=None, activation='none'.

    x: (P, B, I) float, expected strictly binary {0,1} (the layer's contract —
       the fused form x @ (w0 - w1) + sum(w1) is only exact then).
    w: (2, 1, 1, I, O) float binary buffer.
    Returns (P, B, O) float32.
    """
    P, B, I = x.shape
    O = w.shape[-1]
    M = P * B

    op_dtype, acc_dtype = _pick_operand_dtypes(I, O, operand_dtype)
    op_bytes = np.dtype(op_dtype).itemsize

    # TODO(synk): for repeated forwards with fixed generation weights, cache
    # w_diff / bias across calls (they only change on next_generation()/mate()).
    w0 = w[0, 0, 0].astype(jnp.float32)                 # (I, O)
    w1 = w[1, 0, 0].astype(jnp.float32)                 # (I, O)
    w_diff = (w0 - w1).astype(op_dtype)                 # values in {-1,0,1}: exact
    bias = jnp.sum(w1, axis=0, keepdims=True)           # (1, O) f32, exact (<= I)

    xm = x.reshape(M, I)                                # contiguous reshape: no copy, stays f32

    # ---------------- weight-resident 1-D grid (preferred) ----------------
    tm = M if M <= tm_max else tm_max                   # tm_max is a multiple of 32 (packing)

    def _resident_bytes(tm_):
        return (2 * I * O * op_bytes                    # fused weight (double-buffer alloc worst case)
                + 2 * tm_ * I * 4                       # x blocks (f32, cast in kernel)
                + 2 * tm_ * O * 4                       # output blocks (f32)
                + 2 * O * 4)                            # bias

    while M > tm_max and tm > 64 and _resident_bytes(tm) > max_resident_bytes:
        tm //= 2                                        # 512 -> 256 -> 128 -> 64, all 8-aligned

    use_resident = (not force_tiled) and _resident_bytes(tm) <= max_resident_bytes

    compiler_params_common = dict(vmem_limit_bytes=48 * 1024 * 1024)  # safe on v5e/v6e/v7x

    if use_resident:
        grid = (pl.cdiv(M, tm),)                        # ragged M edge handled by masked blocks
        out = pl.pallas_call(
            functools.partial(_resident_kernel, op_dtype=op_dtype, acc_dtype=acc_dtype),
            out_shape=jax.ShapeDtypeStruct((M, O), jnp.float32),
            grid=grid,
            in_specs=[
                pl.BlockSpec((tm, I), lambda i: (i, 0)),   # x rows stream over M
                pl.BlockSpec((I, O), lambda i: (0, 0)),    # fused weight: constant index -> single DMA, resident
                pl.BlockSpec((1, O), lambda i: (0, 0)),    # bias: resident
            ],
            out_specs=pl.BlockSpec((tm, O), lambda i: (i, 0)),
            compiler_params=pltpu.CompilerParams(
                dimension_semantics=("parallel",),          # lets v7x megacore split M across TCs
                **compiler_params_common,
            ),
        )(xm, w_diff, bias)
        return out.reshape(P, B, O)

    # ---------------- fallback: K/N-tiled accumulation ----------------
    tm = min(tm_max, _round_up(M, 8))
    tn = min(tn_max, _round_up(O, 128))
    tk = min(tk_max, _round_up(I, 128))                 # maximize tk: fewer RMW passes over the output
    Kp = _round_up(I, tk)
    Np = _round_up(O, tn)

    if Kp != I:
        xm = jnp.pad(xm, ((0, 0), (0, Kp - I)))
    if (Kp, Np) != (I, O):
        w_diff = jnp.pad(w_diff, ((0, Kp - I), (0, Np - O)))
    if Np != O:
        bias = jnp.pad(bias, ((0, 0), (0, Np - O)))

    grid = (pl.cdiv(M, tm), Np // tn, Kp // tk)
    out = pl.pallas_call(
        functools.partial(_tiled_kernel, op_dtype=op_dtype, acc_dtype=acc_dtype),
        out_shape=jax.ShapeDtypeStruct((M, Np), jnp.float32),
        grid=grid,
        in_specs=[
            pl.BlockSpec((tm, tk), lambda i, j, k: (i, k)),   # x tile (f32, cast in kernel)
            pl.BlockSpec((tk, tn), lambda i, j, k: (k, j)),   # fused weight tile
            pl.BlockSpec((1, tn), lambda i, j, k: (0, j)),    # bias tile
        ],
        out_specs=pl.BlockSpec((tm, tn), lambda i, j, k: (i, j)),  # resident over k
        compiler_params=pltpu.CompilerParams(
            dimension_semantics=("parallel", "parallel", "arbitrary"),
            **compiler_params_common,
        ),
    )(xm, w_diff, bias)
    if Np != O:
        out = out[:, :O]
    return out.reshape(P, B, O)


# ---------------------------------------------------------------------------
# Self-test
# ---------------------------------------------------------------------------
if __name__ == "__main__":
    def reference(x, w):
        # Original (two-matmul, notx) semantics.
        notx = (x == 0.0).astype(jnp.float32)
        return (jnp.einsum("pbi,io->pbo", x, w[0, 0, 0])
                + jnp.einsum("pbi,io->pbo", notx, w[1, 0, 0]))

    fwd = jax.jit(
        evo_binarized_forward,
        static_argnames=("operand_dtype", "force_tiled", "tm_max", "tn_max",
                         "tk_max", "max_resident_bytes"),
    )

    key = jax.random.PRNGKey(0)
    k1, k2, k3, k4 = jax.random.split(key, 4)

    # 1) Small, unaligned shapes -> bf16 operands, weight-resident 1-D grid.
    P, B, I, O = 2, 8, 32, 32
    x1 = jax.random.bernoulli(k1, 0.5, (P, B, I)).astype(jnp.float32)
    w1 = (jax.random.uniform(k2, (2, 1, 1, I, O)) > 0.5).astype(jnp.float32)
    out1 = jax.block_until_ready(fwd(x1, w1))
    assert out1.shape == (P, B, O)
    assert jnp.allclose(out1, reference(x1, w1), atol=1e-5), "mismatch (resident, bf16)"

    # 2) Lane-aligned shapes -> generation-specific narrow operands
    #    (int8 on v5e/v6e, fp8 on v7x, bf16 otherwise), still weight-resident.
    P2, B2, I2, O2 = 2, 32, 256, 384
    x2 = jax.random.bernoulli(k3, 0.5, (P2, B2, I2)).astype(jnp.float32)
    w2 = (jax.random.uniform(k4, (2, 1, 1, I2, O2)) > 0.5).astype(jnp.float32)
    out2 = jax.block_until_ready(fwd(x2, w2))
    assert out2.shape == (P2, B2, O2)
    assert jnp.allclose(out2, reference(x2, w2), atol=1e-5), "mismatch (resident, narrow)"

    # 3) Large-weight fallback path: forced K/N-tiled accumulation (2 K steps).
    out3 = jax.block_until_ready(fwd(x2, w2, force_tiled=True, tk_max=128))
    assert jnp.allclose(out3, reference(x2, w2), atol=1e-5), "mismatch (tiled fallback)"

    # TODO(synk): the offspring path (per-population weights, einsum 'pbi,pbio->pbo'),
    # the 'const'/'batch_norm' activations (running-mean state), and the evolutionary
    # next_generation/mate/to_optimized host-side ops are out of scope for this
    # forward kernel (offspring=None, activation='none').
    print("KERNEL_OK")
</pallas_src>

<mosaic_0001>
module attributes {stable_mosaic.version = 11 : i64} {
  func.func @_resident_kernel(%arg0: i32, %arg1: memref<16x32xf32, #tpu.memory_space<vmem>>, %arg2: memref<32x32xbf16, #tpu.memory_space<vmem>>, %arg3: memref<1x32xf32, #tpu.memory_space<vmem>>, %arg4: memref<16x32xf32, #tpu.memory_space<vmem>>) attributes {dimension_semantics = [#tpu.dimension_semantics<parallel>], iteration_bounds = array<i64: 1>, scalar_prefetch = 0 : i64, scratch_operands = 0 : i64, tpu.core_type = #tpu.core_type<tc>, window_params = [{transform_indices = @transform_0, window_bounds = array<i64: 16, 32>}, {pipeline_mode = #tpu.pipeline_mode<synchronous>, transform_indices = @transform_1, window_bounds = array<i64: 32, 32>}, {pipeline_mode = #tpu.pipeline_mode<synchronous>, transform_indices = @transform_2, window_bounds = array<i64: 1, 32>}, {transform_indices = @transform_3, window_bounds = array<i64: 16, 32>}]} {
    %c0 = arith.constant 0 : index
    %c0_0 = arith.constant 0 : index
    %0 = vector.load %arg1[%c0, %c0_0] : memref<16x32xf32, #tpu.memory_space<vmem>>, vector<16x32xf32>
    %1 = arith.truncf %0 : vector<16x32xf32> to vector<16x32xbf16>
    %c0_1 = arith.constant 0 : index
    %c0_2 = arith.constant 0 : index
    %2 = vector.load %arg2[%c0_1, %c0_2] : memref<32x32xbf16, #tpu.memory_space<vmem>>, vector<32x32xbf16>
    %cst = arith.constant dense<0.000000e+00> : vector<16x32xf32>
    %3 = tpu.matmul %1, %2, %cst {dimension_numbers = #tpu.dot_dimension_numbers<[1], [0], [0], [1], [0, 0, 1, 1], [], []>} : vector<16x32xbf16>, vector<32x32xbf16>, vector<16x32xf32> -> vector<16x32xf32>
    %c0_3 = arith.constant 0 : index
    %c0_4 = arith.constant 0 : index
    %4 = vector.load %arg3[%c0_3, %c0_4] : memref<1x32xf32, #tpu.memory_space<vmem>>, vector<1x32xf32>
    %5 = vector.broadcast %4 : vector<1x32xf32> to vector<16x32xf32>
    %6 = arith.addf %3, %5 : vector<16x32xf32>
    %c0_5 = arith.constant 0 : index
    %c0_6 = arith.constant 0 : index
    %7 = vector.load %arg4[%c0_5, %c0_6] : memref<16x32xf32, #tpu.memory_space<vmem>>, vector<16x32xf32>
    tpu.vector_store %arg4[%c0_5, %c0_6], %6 {strides = array<i32>} : memref<16x32xf32, #tpu.memory_space<vmem>>, vector<16x32xf32>,
    return
  }
  func.func @transform_0(%arg0: i32) -> (i32, i32) {
    %c0_i32 = arith.constant 0 : i32
    %c0_i32_0 = arith.constant 0 : i32
    return %arg0, %c0_i32 : i32, i32
  }
  func.func @transform_1(%arg0: i32) -> (i32, i32) {
    %c0_i32 = arith.constant 0 : i32
    %c0_i32_0 = arith.constant 0 : i32
    %c0_i32_1 = arith.constant 0 : i32
    return %c0_i32, %c0_i32_0 : i32, i32
  }
  func.func @transform_2(%arg0: i32) -> (i32, i32) {
    %c0_i32 = arith.constant 0 : i32
    %c0_i32_0 = arith.constant 0 : i32
    %c0_i32_1 = arith.constant 0 : i32
    return %c0_i32, %c0_i32_0 : i32, i32
  }
  func.func @transform_3(%arg0: i32) -> (i32, i32) {
    %c0_i32 = arith.constant 0 : i32
    %c0_i32_0 = arith.constant 0 : i32
    return %arg0, %c0_i32 : i32, i32
  }
}

</mosaic_0001>

<llo_original>
// kernel: evo_binarized_forward.1
$region0: #{evo_binarized_forward.1}
  #allocation0 [shape = 'u32[]', space=smem, size = 0x4, offset = 0x4, fixed_abs, tag = 'smem constant byte address 0x4 - core index']
  #allocation1 [shape = 'u32[144,128]{1,0:T(1,128)}', space=vmem, size = 0x12000, scoped, tag = 'internal scratch']
  %s0 = inlined_call_operand.vmem [shape: f32[16,32], index: 0, kind: input, shape index: {}]
  %s1 = inlined_call_operand.vmem [shape: bf16[32,32], index: 1, kind: input, shape index: {}]
  %s2 = inlined_call_operand.vmem [shape: f32[1,32], index: 2, kind: input, shape index: {}]
  %s3 = inlined_call_operand.hbm [shape: f32[16,32], index: 3, kind: output, shape index: {}]
  %s4 = sld [smem:[#allocation0]]
  $region22: #{evo_binarized_forward.1} parent=0
    _
  %s6 = ssub.s32 1, %s4
  %s7 = scalar_select 0, %s6, %s4
  $region1: #{evo_binarized_forward.1} parent=0
    #allocation2 [shape = 'u8[8192]{0}', space=vmem, size = 0x2000, scoped, tag = 'output window, operand 0, single buffered']
    #allocation3 [shape = 's32[1]{0}', space=sflag, size = 0x4, scoped, tag = 'scoped memory for evo_binarized_forward.1']
    %8 = vsyncpa [#allocation3], 0
    // Predicated region
    $region2: #{evo_binarized_forward.1} parent=1 // pred_check
      _
    $region3: #{evo_binarized_forward.1} parent=1 // pred_check_branch
      %10 = sbr.rel (0) target = $region5
    $region4: #{evo_binarized_forward.1} parent=1 // pred_region
      _
    $region5: #{evo_binarized_forward.1} parent=1 // pred_fallthru
      _
    // Predicated region
    $region6: #{evo_binarized_forward.1} parent=1 // pred_check
      _
    $region7: #{evo_binarized_forward.1} parent=1 // pred_check_branch
      %12 = sbr.rel (0) target = $region9
    $region8: #{evo_binarized_forward.1} parent=1 // pred_region
      _
    $region9: #{evo_binarized_forward.1} parent=1 // pred_fallthru
      _
    // Predicated region
    $region10: #{evo_binarized_forward.1} parent=1 // pred_check
      _
    $region11: #{evo_binarized_forward.1} parent=1 // pred_check_branch
      %14 = sbr.rel (0) target = $region13
    $region12: #{evo_binarized_forward.1} parent=1 // pred_region
      _
    $region13: #{evo_binarized_forward.1} parent=1 // pred_fallthru
      _
    %v16 = vld [vmem:[%s0] sm:$0xff]
    %v17 = vld [vmem:[%s0 + $0x8] sm:$0xff]
    %v18 = vpack.c.bf16 %v17, %v16
    %v19 = vld [vmem:[%s1] sm:$0xf]
    %v20 = vld [vmem:[%s1 + $0x4] sm:$0xf]
    %v21 = vld [vmem:[%s1 + $0x8] sm:$0xf]
    %v22 = vld [vmem:[%s1 + $0xc] sm:$0xf]
    %v23 = vld [vmem:[%s2] sm:$0x1]
    %v25 = vlaneseq
    %v26 = vshrl.u32 %v25, 7
    %v27 = vsub.s32 0, %v26
    %v28 = vrot.slane %v23, %v27
    %v34 = vunpack.c.l.b16 %v19
    %v35 = vunpack.c.l.b16 %v20
    %v36 = vunpack.c.l.b16 %v21
    %v37 = vunpack.c.l.b16 %v22
    %v38 = vpack.c.b16 %v35, %v34
    %v39 = vpack.c.b16 %v37, %v36
    %vm42 = vcmask 261120
    %v44 = vsel %vm42, %v18, 0
    %46 = vmatprep.subr.bf16.mxu0 0
    %47 = vmatpush1.bf16.msra.mxu0 0
    %48 = vmatprep.subr.bf16.mxu0 0
    %49 = vmatpush1.bf16.msra.mxu0 0
    %50 = vmatprep.subr.bf16.mxu0 0
    %51 = vmatpush1.bf16.msra.mxu0 0
    %52 = vmatprep.subr.bf16.mxu0 0
    %53 = vmatpush1.bf16.msra.mxu0 0
    %54 = vmatprep.subr.bf16.mxu0 0
    %55 = vmatpush1.bf16.msra.mxu0 0
    %56 = vmatprep.subr.bf16.mxu0 0
    %57 = vmatpush1.bf16.msra.mxu0 0
    %58 = vmatprep.subr.bf16.mxu0 0
    %59 = vmatpush1.bf16.msra.mxu0 %v39
    %60 = vmatprep.subr.bf16.mxu0 0
    %61 = vmatpush1.bf16.msra.mxu0 %v38
    %62 = vmatprep.subr.bf16.mxu0 0
    %63 = vmatpush2.bf16.msra.mxu0 0
    %64 = vmatprep.subr.bf16.mxu0 0
    %65 = vmatpush2.bf16.msra.mxu0 0
    %66 = vmatprep.subr.bf16.mxu0 0
    %67 = vmatpush2.bf16.msra.mxu0 0
    %68 = vmatprep.subr.bf16.mxu0 0
    %69 = vmatpush2.bf16.msra.mxu0 0
    %70 = vmatprep.subr.bf16.mxu0 0
    %71 = vmatpush2.bf16.msra.mxu0 0
    %72 = vmatprep.subr.bf16.mxu0 0
    %73 = vmatpush2.bf16.msra.mxu0 0
    %74 = vmatprep.subr.bf16.mxu0 0
    %75 = vmatpush2.bf16.msra.mxu0 0
    %76 = vmatprep.subr.bf16.mxu0 0
    %77 = vmatpush2.bf16.msra.mxu0 0
    %78 = vmatprep.mubr.bf16.mxu0 0
    %79 = vmatmul.mubr.bf16.gmra.mxu0 %v44
    %v80 = vpop.f32.mrf.mxu0
    %v81 = vadd.f32 %v28, %v80
    %v82 = vpop.f32.mrf.mxu0
    %v83 = vpop.f32.mrf.mxu0
    %v84 = vadd.f32 %v28, %v83
    %v85 = vpop.f32.mrf.mxu0
    %86 = vdwg.mxu0
    %87 = vst.msk [vmem:[#allocation2] sm:$0xff] %vm42, %v81
    %88 = vst.msk [vmem:[#allocation2 + $0x8] sm:$0xff] %vm42, %v84
    // Predicated region
    $region14: #{evo_binarized_forward.1} parent=1 // pred_check
      _
    $region15: #{evo_binarized_forward.1} parent=1 // pred_check_branch
      %90 = sbr.rel (0) target = $region17
    $region16: #{evo_binarized_forward.1} parent=1 // pred_region
      %s92 = ssub.s32 256, 256
      %93 = vsyncadd [#allocation3], %s92
      %s94 = sshll.u32 [#allocation2], 4
      %s95 = int_to_ptr.vmem [resolvable:$true] %s94
      %100 = dma.vmem_to_hbm [thread:$0]  %s95, 256, %s3, [#allocation3], 128, 128, 8
    $region17: #{evo_binarized_forward.1} parent=1 // pred_fallthru
      _
    // Predicated region
    $region18: #{evo_binarized_forward.1} parent=1 // pred_check
      _
    $region19: #{evo_binarized_forward.1} parent=1 // pred_check_branch
      %102 = sbr.rel (0) target = $region21
    $region20: #{evo_binarized_forward.1} parent=1 // pred_region
      %103 = dma.done [#allocation3], 256
    $region21: #{evo_binarized_forward.1} parent=1 // pred_fallthru
      _
    %104 = vsyncpa [#allocation3], 1

</llo_original>
